<compile_context>
chip_gen: v7x
topology: tpu7x:2x2x1
jax: 0.10.0
libtpu: 0.0.40
codegen_flags: <defaults>
</compile_context>

<pallas_src>
import jax
import jax.numpy as jnp
from jax.experimental import pallas as pl
from jax.experimental.pallas import tpu as pltpu


def _conv1x1_relu_kernel(x_ref, w_ref, b_ref, o_ref):
    # x_ref: (N, Cin, TS)   w_ref: (Cout, Cin)   b_ref: (Cout, 1)
    # o_ref: (N, Cout, TS)
    x = x_ref[...]
    w = w_ref[...]
    n, cin, ts = x.shape
    cout = w.shape[0]

    # Accumulator starts from the bias: a single sublane/lane broadcast,
    # added exactly once, kept in f32.
    acc = jnp.broadcast_to(b_ref[...][None, :, :], (n, cout, ts)).astype(jnp.float32)

    if cin <= 8:
        # Tiny channel reduction: unrolled VPU broadcast-multiply-adds on
        # lane-dense data instead of a nearly-empty MXU contraction.
        for c in range(cin):
            wc = w[:, c].reshape(1, cout, 1)      # lane/batch broadcast
            xc = x[:, c, :].reshape(n, 1, ts)     # sublane broadcast
            acc = acc + wc * xc
    else:
        # Larger channel counts: let the MXU do the contraction.
        acc = acc + jnp.einsum(
            "nct,oc->not", x, w, preferred_element_type=jnp.float32)

    o_ref[...] = jnp.maximum(acc, 0.0).astype(o_ref.dtype)


def conv1x1_relu_nchw(x_nchw, weight, bias, *, max_tile=2048):
    """Equivalent of nn.Conv2d(in_ch, out_ch, 1) followed by ReLU.

    x_nchw: (N, C_in, H, W) float32
    weight: (C_out, C_in)   float32  (1x1 kernel squeezed)
    bias:   (C_out,)        float32
    returns (N, C_out, H, W) float32
    """
    N, Cin, H, W = x_nchw.shape
    Cout = weight.shape[0]
    HW = H * W

    # Free reshape: NCHW -> (N, Cin, H*W); spatial lands on the lane axis.
    x3 = x_nchw.reshape(N, Cin, HW)

    # Pad spatial up to a lane multiple; use one big tile when it fits so the
    # grid collapses to a single step (per-step overhead ~0.35 us).
    hw_pad = ((HW + 127) // 128) * 128
    ts = min(hw_pad, max_tile)
    hw_pad = ((hw_pad + ts - 1) // ts) * ts
    if hw_pad != HW:
        x3 = jnp.pad(x3, ((0, 0), (0, 0), (0, hw_pad - HW)))

    b2d = bias.reshape(Cout, 1)  # lane-broadcast layout matching the output

    grid = (hw_pad // ts,)
    out3 = pl.pallas_call(
        _conv1x1_relu_kernel,
        out_shape=jax.ShapeDtypeStruct((N, Cout, hw_pad), x3.dtype),
        grid_spec=pltpu.PrefetchScalarGridSpec(
            num_scalar_prefetch=0,
            grid=grid,
            in_specs=[
                pl.BlockSpec((N, Cin, ts), lambda s: (0, 0, s)),
                pl.BlockSpec((Cout, Cin), lambda s: (0, 0)),   # resident weight
                pl.BlockSpec((Cout, 1), lambda s: (0, 0)),     # resident bias
            ],
            out_specs=pl.BlockSpec((N, Cout, ts), lambda s: (0, 0, s)),
        ),
        compiler_params=pltpu.CompilerParams(
            dimension_semantics=("parallel",)),
    )(x3, weight, b2d)

    if hw_pad != HW:
        out3 = out3[:, :, :HW]
    # Free reshape back to NCHW.
    return out3.reshape(N, Cout, H, W)


if __name__ == "__main__":
    # Shapes consistent with the module: batch=2, in_ch=4, out_ch=8, spatial=16.
    N, Cin, Cout, Hs, Ws = 2, 4, 8, 16, 16

    key = jax.random.PRNGKey(0)
    kx, kw, kb = jax.random.split(key, 3)

    x = jax.random.normal(kx, (N, Cin, Hs, Ws), dtype=jnp.float32)
    # Deterministic parameter init (synthetic, not a checkpoint load).
    weight = jax.random.normal(kw, (Cout, Cin), dtype=jnp.float32) * 0.1
    bias = jax.random.normal(kb, (Cout,), dtype=jnp.float32) * 0.1

    fn = jax.jit(conv1x1_relu_nchw)
    out = jax.block_until_ready(fn(x, weight, bias))

    # Reference check in plain JAX (same math as PyTorch Conv2d(k=1)+ReLU).
    ref = jnp.einsum("nchw,oc->nohw", x, weight) + bias[None, :, None, None]
    ref = jnp.maximum(ref, 0.0)
    assert out.shape == (N, Cout, Hs, Ws)
    assert jnp.allclose(out, ref, atol=1e-5, rtol=1e-5)

    print("KERNEL_OK")
</pallas_src>

<mosaic_0001>
module attributes {stable_mosaic.version = 11 : i64} {
  func.func @_conv1x1_relu_kernel(%arg0: i32, %arg1: memref<2x4x256xf32, #tpu.memory_space<vmem>>, %arg2: memref<8x4xf32, #tpu.memory_space<vmem>>, %arg3: memref<8x1xf32, #tpu.memory_space<vmem>>, %arg4: memref<2x8x256xf32, #tpu.memory_space<vmem>>) attributes {dimension_semantics = [#tpu.dimension_semantics<parallel>], iteration_bounds = array<i64: 1>, scalar_prefetch = 0 : i64, scratch_operands = 0 : i64, tpu.core_type = #tpu.core_type<tc>, window_params = [{transform_indices = @transform_0, window_bounds = array<i64: 2, 4, 256>}, {pipeline_mode = #tpu.pipeline_mode<synchronous>, transform_indices = @transform_1, window_bounds = array<i64: 8, 4>}, {pipeline_mode = #tpu.pipeline_mode<synchronous>, transform_indices = @transform_2, window_bounds = array<i64: 8, 1>}, {transform_indices = @transform_3, window_bounds = array<i64: 2, 8, 256>}]} {
    %c0 = arith.constant 0 : index
    %c0_0 = arith.constant 0 : index
    %c0_1 = arith.constant 0 : index
    %0 = vector.load %arg1[%c0, %c0_0, %c0_1] : memref<2x4x256xf32, #tpu.memory_space<vmem>>, vector<2x4x256xf32>
    %c0_2 = arith.constant 0 : index
    %c0_3 = arith.constant 0 : index
    %1 = vector.load %arg2[%c0_2, %c0_3] : memref<8x4xf32, #tpu.memory_space<vmem>>, vector<8x4xf32>
    %c0_4 = arith.constant 0 : index
    %c0_5 = arith.constant 0 : index
    %2 = vector.load %arg3[%c0_4, %c0_5] : memref<8x1xf32, #tpu.memory_space<vmem>>, vector<8x1xf32>
    %3 = vector.shape_cast %2 : vector<8x1xf32> to vector<1x8x1xf32>
    %4 = vector.shape_cast %3 : vector<1x8x1xf32> to vector<1x8x1xf32>
    %5 = vector.broadcast %4 : vector<1x8x1xf32> to vector<2x8x256xf32>
    %6 = vector.extract_strided_slice %1 {offsets = [0, 0], sizes = [8, 1], strides = [1, 1]} : vector<8x4xf32> to vector<8x1xf32>
    %7 = vector.shape_cast %6 : vector<8x1xf32> to vector<8xf32>
    %8 = vector.shape_cast %7 : vector<8xf32> to vector<1x8x1xf32>
    %9 = vector.extract_strided_slice %0 {offsets = [0, 0, 0], sizes = [2, 1, 256], strides = [1, 1, 1]} : vector<2x4x256xf32> to vector<2x1x256xf32>
    %10 = vector.shape_cast %9 : vector<2x1x256xf32> to vector<2x256xf32>
    %11 = vector.shape_cast %10 : vector<2x256xf32> to vector<2x1x256xf32>
    %12 = vector.broadcast %8 : vector<1x8x1xf32> to vector<2x8x256xf32>
    %13 = vector.broadcast %11 : vector<2x1x256xf32> to vector<2x8x256xf32>
    %14 = arith.mulf %12, %13 : vector<2x8x256xf32>
    %15 = arith.addf %5, %14 : vector<2x8x256xf32>
    %16 = vector.extract_strided_slice %1 {offsets = [0, 1], sizes = [8, 1], strides = [1, 1]} : vector<8x4xf32> to vector<8x1xf32>
    %17 = vector.shape_cast %16 : vector<8x1xf32> to vector<8xf32>
    %18 = vector.shape_cast %17 : vector<8xf32> to vector<1x8x1xf32>
    %19 = vector.extract_strided_slice %0 {offsets = [0, 1, 0], sizes = [2, 1, 256], strides = [1, 1, 1]} : vector<2x4x256xf32> to vector<2x1x256xf32>
    %20 = vector.shape_cast %19 : vector<2x1x256xf32> to vector<2x256xf32>
    %21 = vector.shape_cast %20 : vector<2x256xf32> to vector<2x1x256xf32>
    %22 = vector.broadcast %18 : vector<1x8x1xf32> to vector<2x8x256xf32>
    %23 = vector.broadcast %21 : vector<2x1x256xf32> to vector<2x8x256xf32>
    %24 = arith.mulf %22, %23 : vector<2x8x256xf32>
    %25 = arith.addf %15, %24 : vector<2x8x256xf32>
    %26 = vector.extract_strided_slice %1 {offsets = [0, 2], sizes = [8, 1], strides = [1, 1]} : vector<8x4xf32> to vector<8x1xf32>
    %27 = vector.shape_cast %26 : vector<8x1xf32> to vector<8xf32>
    %28 = vector.shape_cast %27 : vector<8xf32> to vector<1x8x1xf32>
    %29 = vector.extract_strided_slice %0 {offsets = [0, 2, 0], sizes = [2, 1, 256], strides = [1, 1, 1]} : vector<2x4x256xf32> to vector<2x1x256xf32>
    %30 = vector.shape_cast %29 : vector<2x1x256xf32> to vector<2x256xf32>
    %31 = vector.shape_cast %30 : vector<2x256xf32> to vector<2x1x256xf32>
    %32 = vector.broadcast %28 : vector<1x8x1xf32> to vector<2x8x256xf32>
    %33 = vector.broadcast %31 : vector<2x1x256xf32> to vector<2x8x256xf32>
    %34 = arith.mulf %32, %33 : vector<2x8x256xf32>
    %35 = arith.addf %25, %34 : vector<2x8x256xf32>
    %36 = vector.extract_strided_slice %1 {offsets = [0, 3], sizes = [8, 1], strides = [1, 1]} : vector<8x4xf32> to vector<8x1xf32>
    %37 = vector.shape_cast %36 : vector<8x1xf32> to vector<8xf32>
    %38 = vector.shape_cast %37 : vector<8xf32> to vector<1x8x1xf32>
    %39 = vector.extract_strided_slice %0 {offsets = [0, 3, 0], sizes = [2, 1, 256], strides = [1, 1, 1]} : vector<2x4x256xf32> to vector<2x1x256xf32>
    %40 = vector.shape_cast %39 : vector<2x1x256xf32> to vector<2x256xf32>
    %41 = vector.shape_cast %40 : vector<2x256xf32> to vector<2x1x256xf32>
    %42 = vector.broadcast %38 : vector<1x8x1xf32> to vector<2x8x256xf32>
    %43 = vector.broadcast %41 : vector<2x1x256xf32> to vector<2x8x256xf32>
    %44 = arith.mulf %42, %43 : vector<2x8x256xf32>
    %45 = arith.addf %35, %44 : vector<2x8x256xf32>
    %cst = arith.constant 0.000000e+00 : f32
    %46 = vector.broadcast %cst : f32 to vector<2x8x256xf32>
    %47 = arith.maximumf %45, %46 : vector<2x8x256xf32>
    %c0_6 = arith.constant 0 : index
    %c0_7 = arith.constant 0 : index
    %c0_8 = arith.constant 0 : index
    %48 = vector.load %arg4[%c0_6, %c0_7, %c0_8] : memref<2x8x256xf32, #tpu.memory_space<vmem>>, vector<2x8x256xf32>
    tpu.vector_store %arg4[%c0_6, %c0_7, %c0_8], %47 {strides = array<i32>} : memref<2x8x256xf32, #tpu.memory_space<vmem>>, vector<2x8x256xf32>,
    return
  }
  func.func @transform_0(%arg0: i32) -> (i32, i32, i32) {
    %c0_i32 = arith.constant 0 : i32
    %c0_i32_0 = arith.constant 0 : i32
    %c0_i32_1 = arith.constant 0 : i32
    return %c0_i32, %c0_i32_0, %arg0 : i32, i32, i32
  }
  func.func @transform_1(%arg0: i32) -> (i32, i32) {
    %c0_i32 = arith.constant 0 : i32
    %c0_i32_0 = arith.constant 0 : i32
    %c0_i32_1 = arith.constant 0 : i32
    return %c0_i32, %c0_i32_0 : i32, i32
  }
  func.func @transform_2(%arg0: i32) -> (i32, i32) {
    %c0_i32 = arith.constant 0 : i32
    %c0_i32_0 = arith.constant 0 : i32
    %c0_i32_1 = arith.constant 0 : i32
    return %c0_i32, %c0_i32_0 : i32, i32
  }
  func.func @transform_3(%arg0: i32) -> (i32, i32, i32) {
    %c0_i32 = arith.constant 0 : i32
    %c0_i32_0 = arith.constant 0 : i32
    %c0_i32_1 = arith.constant 0 : i32
    return %c0_i32, %c0_i32_0, %arg0 : i32, i32, i32
  }
}

</mosaic_0001>

<llo_original>
// kernel: conv1x1_relu_nchw.1
$region0: #{conv1x1_relu_nchw.1}
  #allocation0 [shape = 'u32[]', space=smem, size = 0x4, offset = 0x4, fixed_abs, tag = 'smem constant byte address 0x4 - core index']
  #allocation1 [shape = 'u32[144,128]{1,0:T(1,128)}', space=vmem, size = 0x12000, scoped, tag = 'internal scratch']
  %s0 = inlined_call_operand.vmem [shape: f32[2,4,256], index: 0, kind: input, shape index: {}]
  %s1 = inlined_call_operand.vmem [shape: f32[8,4], index: 1, kind: input, shape index: {}]
  %s2 = inlined_call_operand.vmem [shape: f32[8,1], index: 2, kind: input, shape index: {}]
  %s3 = inlined_call_operand.vmem [shape: f32[2,8,256], index: 3, kind: output, shape index: {}]
  %s4 = sld [smem:[#allocation0]]
  $region22: #{conv1x1_relu_nchw.1} parent=0
    _
  %s6 = ssub.s32 1, %s4
  %s7 = scalar_select 0, %s6, %s4
  // Predicated region
  $region2: #{conv1x1_relu_nchw.1} parent=0 // pred_check
    _
  $region3: #{conv1x1_relu_nchw.1} parent=0 // pred_check_branch
    %9 = sbr.rel (0) target = $region5
  $region4: #{conv1x1_relu_nchw.1} parent=0 // pred_region
    _
  $region5: #{conv1x1_relu_nchw.1} parent=0 // pred_fallthru
    _
  // Predicated region
  $region6: #{conv1x1_relu_nchw.1} parent=0 // pred_check
    _
  $region7: #{conv1x1_relu_nchw.1} parent=0 // pred_check_branch
    %11 = sbr.rel (0) target = $region9
  $region8: #{conv1x1_relu_nchw.1} parent=0 // pred_region
    _
  $region9: #{conv1x1_relu_nchw.1} parent=0 // pred_fallthru
    _
  // Predicated region
  $region10: #{conv1x1_relu_nchw.1} parent=0 // pred_check
    _
  $region11: #{conv1x1_relu_nchw.1} parent=0 // pred_check_branch
    %13 = sbr.rel (0) target = $region13
  $region12: #{conv1x1_relu_nchw.1} parent=0 // pred_region
    _
  $region13: #{conv1x1_relu_nchw.1} parent=0 // pred_fallthru
    _
  %v14 = vld [vmem:[%s0] sm:$0xff]
  %v15 = vld [vmem:[%s0 + $0x8] sm:$0xff]
  %v16 = vld [vmem:[%s1] sm:$0xff]
  %v17 = vld [vmem:[%s2] sm:$0xff]
  %19 = vset.pattern.permute.xlu0 0
  %20 = vperm.xlu0 %19, %v17
  %v21 = vpop.permute.xlu0 %20
  %24 = vset.pattern.permute.xlu0 0
  %25 = vperm.xlu0 %24, %v16
  %v26 = vpop.permute.xlu0 %25
  %v30 = vlaneseq
  %v31 = vshrl.u32 %v30, 7
  %v32 = vsub.s32 0, %v31
  %v33 = vrot.slane %v14, %v32
  %v34 = vlaneseq
  %v35 = vshrl.u32 %v34, 7
  %v36 = vsub.s32 4, %v35
  %v37 = vrot.slane %v14, %v36
  %v38 = vlaneseq
  %v39 = vshrl.u32 %v38, 7
  %v40 = vsub.s32 0, %v39
  %v41 = vrot.slane %v15, %v40
  %v42 = vlaneseq
  %v43 = vshrl.u32 %v42, 7
  %v44 = vsub.s32 4, %v43
  %v45 = vrot.slane %v15, %v44
  %v50 = vlaneseq
  %v51 = vshrl.u32 %v50, 7
  %v52 = vsub.s32 0, %v51
  %v53 = vrot.slane %v33, %v52
  %v54 = vlaneseq
  %v55 = vshrl.u32 %v54, 7
  %v56 = vsub.s32 0, %v55
  %v57 = vrot.slane %v37, %v56
  %v58 = vlaneseq
  %v59 = vshrl.u32 %v58, 7
  %v60 = vsub.s32 0, %v59
  %v61 = vrot.slane %v41, %v60
  %v62 = vlaneseq
  %v63 = vshrl.u32 %v62, 7
  %v64 = vsub.s32 0, %v63
  %v65 = vrot.slane %v45, %v64
  %v66 = vmul.f32 %v26, %v53
  %v67 = vmul.f32 %v26, %v57
  %v68 = vmul.f32 %v26, %v61
  %v69 = vmul.f32 %v26, %v65
  %v70 = vadd.f32 %v21, %v66
  %v71 = vadd.f32 %v21, %v67
  %v72 = vadd.f32 %v21, %v68
  %v73 = vadd.f32 %v21, %v69
  %74 = vset.pattern.permute.xlu0 1
  %75 = vperm.xlu0 %74, %v16
  %v76 = vpop.permute.xlu0 %75
  %v78 = vlaneseq
  %v79 = vshrl.u32 %v78, 7
  %v80 = vsub.s32 1, %v79
  %v81 = vrot.slane %v14, %v80
  %v82 = vlaneseq
  %v83 = vshrl.u32 %v82, 7
  %v84 = vsub.s32 5, %v83
  %v85 = vrot.slane %v14, %v84
  %v86 = vlaneseq
  %v87 = vshrl.u32 %v86, 7
  %v88 = vsub.s32 1, %v87
  %v89 = vrot.slane %v15, %v88
  %v90 = vlaneseq
  %v91 = vshrl.u32 %v90, 7
  %v92 = vsub.s32 5, %v91
  %v93 = vrot.slane %v15, %v92
  %v98 = vlaneseq
  %v99 = vshrl.u32 %v98, 7
  %v100 = vsub.s32 1, %v99
  %v101 = vrot.slane %v81, %v100
  %v102 = vlaneseq
  %v103 = vshrl.u32 %v102, 7
  %v104 = vsub.s32 1, %v103
  %v105 = vrot.slane %v85, %v104
  %v106 = vlaneseq
  %v107 = vshrl.u32 %v106, 7
  %v108 = vsub.s32 1, %v107
  %v109 = vrot.slane %v89, %v108
  %v110 = vlaneseq
  %v111 = vshrl.u32 %v110, 7
  %v112 = vsub.s32 1, %v111
  %v113 = vrot.slane %v93, %v112
  %v114 = vmul.f32 %v76, %v101
  %v115 = vmul.f32 %v76, %v105
  %v116 = vmul.f32 %v76, %v109
  %v117 = vmul.f32 %v76, %v113
  %v118 = vadd.f32 %v70, %v114
  %v119 = vadd.f32 %v71, %v115
  %v120 = vadd.f32 %v72, %v116
  %v121 = vadd.f32 %v73, %v117
  %122 = vset.pattern.permute.xlu0 2
  %123 = vperm.xlu0 %122, %v16
  %v124 = vpop.permute.xlu0 %123
  %v126 = vlaneseq
  %v127 = vshrl.u32 %v126, 7
  %v128 = vsub.s32 2, %v127
  %v129 = vrot.slane %v14, %v128
  %v130 = vlaneseq
  %v131 = vshrl.u32 %v130, 7
  %v132 = vsub.s32 6, %v131
  %v133 = vrot.slane %v14, %v132
  %v134 = vlaneseq
  %v135 = vshrl.u32 %v134, 7
  %v136 = vsub.s32 2, %v135
  %v137 = vrot.slane %v15, %v136
  %v138 = vlaneseq
  %v139 = vshrl.u32 %v138, 7
  %v140 = vsub.s32 6, %v139
  %v141 = vrot.slane %v15, %v140
  %v146 = vlaneseq
  %v147 = vshrl.u32 %v146, 7
  %v148 = vsub.s32 2, %v147
  %v149 = vrot.slane %v129, %v148
  %v150 = vlaneseq
  %v151 = vshrl.u32 %v150, 7
  %v152 = vsub.s32 2, %v151
  %v153 = vrot.slane %v133, %v152
  %v154 = vlaneseq
  %v155 = vshrl.u32 %v154, 7
  %v156 = vsub.s32 2, %v155
  %v157 = vrot.slane %v137, %v156
  %v158 = vlaneseq
  %v159 = vshrl.u32 %v158, 7
  %v160 = vsub.s32 2, %v159
  %v161 = vrot.slane %v141, %v160
  %v162 = vmul.f32 %v124, %v149
  %v163 = vmul.f32 %v124, %v153
  %v164 = vmul.f32 %v124, %v157
  %v165 = vmul.f32 %v124, %v161
  %v166 = vadd.f32 %v118, %v162
  %v167 = vadd.f32 %v119, %v163
  %v168 = vadd.f32 %v120, %v164
  %v169 = vadd.f32 %v121, %v165
  %170 = vset.pattern.permute.xlu0 3
  %171 = vperm.xlu0 %170, %v16
  %v172 = vpop.permute.xlu0 %171
  %v174 = vlaneseq
  %v175 = vshrl.u32 %v174, 7
  %v176 = vsub.s32 3, %v175
  %v177 = vrot.slane %v14, %v176
  %v178 = vlaneseq
  %v179 = vshrl.u32 %v178, 7
  %v180 = vsub.s32 7, %v179
  %v181 = vrot.slane %v14, %v180
  %v182 = vlaneseq
  %v183 = vshrl.u32 %v182, 7
  %v184 = vsub.s32 3, %v183
  %v185 = vrot.slane %v15, %v184
  %v186 = vlaneseq
  %v187 = vshrl.u32 %v186, 7
  %v188 = vsub.s32 7, %v187
  %v189 = vrot.slane %v15, %v188
  %v194 = vlaneseq
  %v195 = vshrl.u32 %v194, 7
  %v196 = vsub.s32 3, %v195
  %v197 = vrot.slane %v177, %v196
  %v198 = vlaneseq
  %v199 = vshrl.u32 %v198, 7
  %v200 = vsub.s32 3, %v199
  %v201 = vrot.slane %v181, %v200
  %v202 = vlaneseq
  %v203 = vshrl.u32 %v202, 7
  %v204 = vsub.s32 3, %v203
  %v205 = vrot.slane %v185, %v204
  %v206 = vlaneseq
  %v207 = vshrl.u32 %v206, 7
  %v208 = vsub.s32 3, %v207
  %v209 = vrot.slane %v189, %v208
  %v210 = vmul.f32 %v172, %v197
  %v211 = vmul.f32 %v172, %v201
  %v212 = vmul.f32 %v172, %v205
  %v213 = vmul.f32 %v172, %v209
  %v214 = vadd.f32 %v166, %v210
  %v215 = vadd.f32 %v167, %v211
  %v216 = vadd.f32 %v168, %v212
  %v217 = vadd.f32 %v169, %v213
  %v218 = vmax.f32 %v214, 0.0
  %v219 = vmax.f32 %v215, 0.0
  %v220 = vmax.f32 %v216, 0.0
  %v221 = vmax.f32 %v217, 0.0
  %222 = vst [vmem:[%s3] sm:$0xff] %v218
  %223 = vst [vmem:[%s3 + $0x8] sm:$0xff] %v219
  %224 = vst [vmem:[%s3 + $0x10] sm:$0xff] %v220
  %225 = vst [vmem:[%s3 + $0x18] sm:$0xff] %v221
  // Predicated region
  $region14: #{conv1x1_relu_nchw.1} parent=0 // pred_check
    _
  $region15: #{conv1x1_relu_nchw.1} parent=0 // pred_check_branch
    %227 = sbr.rel (0) target = $region17
  $region16: #{conv1x1_relu_nchw.1} parent=0 // pred_region
    _
  $region17: #{conv1x1_relu_nchw.1} parent=0 // pred_fallthru
    _
  // Predicated region
  $region18: #{conv1x1_relu_nchw.1} parent=0 // pred_check
    _
  $region19: #{conv1x1_relu_nchw.1} parent=0 // pred_check_branch
    %229 = sbr.rel (0) target = $region21
  $region20: #{conv1x1_relu_nchw.1} parent=0 // pred_region
    _
  $region21: #{conv1x1_relu_nchw.1} parent=0 // pred_fallthru
    _

</llo_original>
